<compile_context>
chip_gen: v7x
topology: tpu7x:2x2x1
jax: 0.10.0
libtpu: 0.0.40
codegen_flags: <defaults>
</compile_context>

<pallas_src>
import functools

import jax
import jax.numpy as jnp
from jax.experimental import pallas as pl
from jax.experimental.pallas import tpu as pltpu

LANE = 128      # vreg lane width
SUBLANE = 8     # f32 sublane count


def _round_down(x, m):
    return (x // m) * m


def _device_tuned():
    """Returns (max_row_tile, vmem_limit_bytes) tuned per TPU generation."""
    try:
        kind = jax.devices()[0].device_kind.lower()
    except Exception:
        kind = ""
    if "v6" in kind:
        # v6e: 128 MiB physical VMEM.  (4096,128) f32 blocks = 2 MiB; 2 inputs
        # x 2 pipeline buffers (8 MiB) + elementwise block temporaries fit with
        # room to spare once the scoped limit is raised.
        return 4096, 48 * 1024 * 1024
    # v5e (16 MiB default scoped VMEM) and v7x (64 MiB physical): 2048 rows
    # (1 MiB f32 per input per buffer) keeps buffers + temporaries well clear
    # of the limit while still amortizing the ~0.35 us per-grid-step overhead.
    return 2048, None


def _focal_kernel(x_ref, t_ref, out_ref, *, gamma, row_tile):
    """Streaming focal-loss partial sum over (row_tile, 128) tiles.

    Grid = (shards, steps).  The leading axis is 'parallel' (TensorCore
    sharding on multi-core chips); the trailing axis is the reduction.
    out_ref is a per-shard (1, 8, 128) f32 partial-sum block that stays
    resident in VMEM across the reduction axis.
    """
    j = pl.program_id(1)

    @pl.when(j == 0)
    def _init():
        out_ref[...] = jnp.zeros_like(out_ref)

    x = x_ref[...].astype(jnp.float32)
    t = t_ref[...].astype(jnp.float32)

    # Stable BCE-with-logits in softplus form (1 exp + 1 log per element);
    # identical to PyTorch's  x - x*t + max(-x,0) + log(e^-max + e^(-x-max)).
    bce = x - x * t + jnp.maximum(-x, 0.0) + jnp.log1p(jnp.exp(-jnp.abs(x)))

    # Focal modulating factor  exp(gamma * logsigmoid(z)) == sigmoid(z)**gamma,
    # with z = -x*(2t-1) = x - 2*x*t.
    z = x - 2.0 * x * t
    e = jnp.exp(-jnp.abs(z))                                  # one exp
    g_int = int(gamma) if float(gamma) == int(gamma) else None
    if g_int is not None and 0 <= g_int <= 8:
        # Static integer gamma: sigmoid(z)**g via a numerically stable sigmoid
        # and a few VALU multiplies -- drops the exp+log pair of the generic
        # path.  sigmoid(z) = where(z>=0, 1, e) / (1+e); the f32 divide lowers
        # to a single EUP reciprocal + Newton refinement (full precision).
        sig = jnp.where(z >= 0.0, 1.0, e) / (1.0 + e)
        if g_int == 0:
            mod = jnp.ones_like(sig)
        else:
            mod = sig
            for _ in range(g_int - 1):
                mod = mod * sig
    else:
        # Generic gamma: exp(gamma * logsigmoid(z)) with stable logsigmoid.
        invprobs = jnp.minimum(z, 0.0) - jnp.log1p(e)
        mod = jnp.exp(invprobs * gamma)

    loss = mod * bce

    # Reduce (row_tile, 128) -> (1, 8, 128) with pure vreg adds (no XLU / SMEM
    # scalar RMW in the hot loop) and accumulate into the resident block.
    out_ref[...] += jnp.sum(
        loss.reshape(row_tile // SUBLANE, SUBLANE, LANE), axis=0, keepdims=True)


def _elementwise_focal(x, t, gamma):
    """Plain-JAX focal terms -- only used for the (< one block) ragged tail."""
    x = x.astype(jnp.float32)
    t = t.astype(jnp.float32)
    bce = x - x * t + jnp.maximum(-x, 0.0) + jnp.log1p(jnp.exp(-jnp.abs(x)))
    invprobs = jax.nn.log_sigmoid(x - 2.0 * x * t)
    return jnp.exp(invprobs * gamma) * bce


@functools.partial(jax.jit, static_argnames=("gamma",))
def focal_loss(logits, targets, *, gamma):
    """Pallas TPU implementation of FocalLoss.forward (mean reduction)."""
    if logits.shape != targets.shape:
        raise ValueError(
            "Target size ({}) must be the same as input size ({})".format(
                targets.shape, logits.shape))

    n = logits.size
    xf = logits.reshape(-1)
    tf = targets.reshape(-1)

    max_row_tile, vmem_limit = _device_tuned()

    rows_total = n // LANE                          # full 128-lane rows
    row_tile = min(max_row_tile, max(SUBLANE, _round_down(rows_total, SUBLANE)))
    num_blocks = rows_total // row_tile             # whole (row_tile,128) blocks
    # Two shards when there is enough work: ~2x on multi-core parts (v7x);
    # harmless sequential work on single-core v5e/v6e.
    shards = 2 if num_blocks >= 2 else 1
    blocks_per_shard = num_blocks // shards
    main_rows = shards * blocks_per_shard * row_tile
    n_main = main_rows * LANE                       # elements covered by kernel

    total = jnp.float32(0.0)

    if n_main > 0:
        if n % LANE == 0:
            # Pure reshape of the contiguous flat array: zero-copy.  The grid
            # simply never addresses rows past main_rows.
            x2 = xf.reshape(rows_total, LANE)
            t2 = tf.reshape(rows_total, LANE)
        else:
            # 128-aligned prefix (no jnp.pad: nothing is written past n, the
            # kernel never touches the tail, no in-kernel masking runs).
            x2 = xf[:rows_total * LANE].reshape(rows_total, LANE)
            t2 = tf[:rows_total * LANE].reshape(rows_total, LANE)

        kernel = functools.partial(_focal_kernel, gamma=float(gamma),
                                   row_tile=row_tile)
        in_map = lambda s, j: (s * blocks_per_shard + j, 0)

        partials = pl.pallas_call(
            kernel,
            out_shape=jax.ShapeDtypeStruct((shards, SUBLANE, LANE), jnp.float32),
            grid_spec=pltpu.PrefetchScalarGridSpec(
                num_scalar_prefetch=0,
                grid=(shards, blocks_per_shard),
                in_specs=[
                    pl.BlockSpec((row_tile, LANE), in_map),
                    pl.BlockSpec((row_tile, LANE), in_map),
                ],
                out_specs=pl.BlockSpec((1, SUBLANE, LANE),
                                       lambda s, j: (s, 0, 0)),
            ),
            compiler_params=pltpu.CompilerParams(
                dimension_semantics=("parallel", "arbitrary"),
                vmem_limit_bytes=vmem_limit),
        )(x2, t2)
        total = total + jnp.sum(partials)

    if n_main < n:
        # Ragged tail (< shards * row_tile * 128 elements): plain JAX.
        total = total + jnp.sum(
            _elementwise_focal(xf[n_main:], tf[n_main:], float(gamma)))

    return total / n


def _reference(x, t, gamma):
    x = x.astype(jnp.float32)
    t = t.astype(jnp.float32)
    max_val = jnp.maximum(-x, 0.0)
    loss = x - x * t + max_val + jnp.log(jnp.exp(-max_val) + jnp.exp(-x - max_val))
    invprobs = jax.nn.log_sigmoid(-x * (t * 2.0 - 1.0))
    return jnp.mean(jnp.exp(invprobs * gamma) * loss)


def _check(shape, gamma, key):
    k1, k2 = jax.random.split(key)
    logits = jax.random.normal(k1, shape, dtype=jnp.float32)
    targets = (jax.random.uniform(k2, shape) > 0.5).astype(jnp.float32)
    loss = jax.block_until_ready(focal_loss(logits, targets, gamma=gamma))
    ref = _reference(logits, targets, gamma)
    assert jnp.allclose(loss, ref, rtol=3e-5, atol=1e-6), (shape, gamma, loss, ref)


if __name__ == "__main__":
    key = jax.random.PRNGKey(0)
    keys = jax.random.split(key, 4)

    # (N, C, H, W) binary-segmentation-style shapes.
    _check((2, 4, 16, 16), 2.0, keys[0])     # block-aligned, kernel-only path
    _check((2, 3, 10, 10), 2.0, keys[1])     # tiny ragged: pure-JAX tail path
    _check((2, 4, 16, 17), 2.0, keys[2])     # kernel + ragged tail, zero-copy
    _check((4, 8, 256, 128), 1.5, keys[3])   # multi-block, 2-shard, generic gamma

    print("KERNEL_OK")
</pallas_src>

<mosaic_0001>
module attributes {stable_mosaic.version = 11 : i64} {
  func.func @_focal_kernel(%arg0: i32, %arg1: i32, %arg2: memref<16x128xf32, #tpu.memory_space<vmem>>, %arg3: memref<16x128xf32, #tpu.memory_space<vmem>>, %arg4: memref<1x8x128xf32, #tpu.memory_space<vmem>>) attributes {dimension_semantics = [#tpu.dimension_semantics<parallel>, #tpu.dimension_semantics<arbitrary>], iteration_bounds = array<i64: 1, 1>, scalar_prefetch = 0 : i64, scratch_operands = 0 : i64, tpu.core_type = #tpu.core_type<tc>, window_params = [{transform_indices = @transform_0, window_bounds = array<i64: 16, 128>}, {transform_indices = @transform_1, window_bounds = array<i64: 16, 128>}, {transform_indices = @transform_2, window_bounds = array<i64: 1, 8, 128>}]} {
    %c0_i32 = arith.constant 0 : i32
    %0 = arith.cmpi eq, %arg1, %c0_i32 : i32
    %1 = arith.extui %0 : i1 to i32
    %c0_i32_0 = arith.constant 0 : i32
    %2 = arith.cmpi ne, %1, %c0_i32_0 : i32
    scf.if %2 {
      %cst_18 = arith.constant 0.000000e+00 : f32
      %41 = vector.broadcast %cst_18 : f32 to vector<1x8x128xf32>
      %c0_19 = arith.constant 0 : index
      %c0_20 = arith.constant 0 : index
      %c0_21 = arith.constant 0 : index
      %42 = vector.load %arg4[%c0_19, %c0_20, %c0_21] : memref<1x8x128xf32, #tpu.memory_space<vmem>>, vector<1x8x128xf32>
      tpu.vector_store %arg4[%c0_19, %c0_20, %c0_21], %41 {strides = array<i32>} : memref<1x8x128xf32, #tpu.memory_space<vmem>>, vector<1x8x128xf32>,
    } else {
    }
    %c0 = arith.constant 0 : index
    %c0_1 = arith.constant 0 : index
    %3 = vector.load %arg2[%c0, %c0_1] : memref<16x128xf32, #tpu.memory_space<vmem>>, vector<16x128xf32>
    %c0_2 = arith.constant 0 : index
    %c0_3 = arith.constant 0 : index
    %4 = vector.load %arg3[%c0_2, %c0_3] : memref<16x128xf32, #tpu.memory_space<vmem>>, vector<16x128xf32>
    %5 = arith.mulf %3, %4 : vector<16x128xf32>
    %6 = arith.subf %3, %5 : vector<16x128xf32>
    %cst = arith.constant 0.000000e+00 : f32
    %7 = vector.broadcast %cst : f32 to vector<16x128xf32>
    %8 = arith.subf %7, %3 : vector<16x128xf32>
    %cst_4 = arith.constant 0.000000e+00 : f32
    %9 = vector.broadcast %cst_4 : f32 to vector<16x128xf32>
    %10 = arith.maximumf %8, %9 : vector<16x128xf32>
    %11 = arith.addf %6, %10 : vector<16x128xf32>
    %12 = math.absf %3 : vector<16x128xf32>
    %cst_5 = arith.constant 0.000000e+00 : f32
    %13 = vector.broadcast %cst_5 : f32 to vector<16x128xf32>
    %14 = arith.subf %13, %12 : vector<16x128xf32>
    %15 = math.exp %14 : vector<16x128xf32>
    %16 = math.log1p %15 : vector<16x128xf32>
    %17 = arith.addf %11, %16 : vector<16x128xf32>
    %cst_6 = arith.constant 2.000000e+00 : f32
    %18 = vector.broadcast %cst_6 : f32 to vector<16x128xf32>
    %19 = arith.mulf %18, %3 : vector<16x128xf32>
    %20 = arith.mulf %19, %4 : vector<16x128xf32>
    %21 = arith.subf %3, %20 : vector<16x128xf32>
    %22 = math.absf %21 : vector<16x128xf32>
    %cst_7 = arith.constant 0.000000e+00 : f32
    %23 = vector.broadcast %cst_7 : f32 to vector<16x128xf32>
    %24 = arith.subf %23, %22 : vector<16x128xf32>
    %25 = math.exp %24 : vector<16x128xf32>
    %cst_8 = arith.constant 0.000000e+00 : f32
    %26 = vector.broadcast %cst_8 : f32 to vector<16x128xf32>
    %27 = arith.cmpf oge, %21, %26 : vector<16x128xf32>
    %cst_9 = arith.constant 1.000000e+00 : f32
    %28 = vector.broadcast %cst_9 : f32 to vector<16x128xf32>
    %29 = arith.select %27, %28, %25 : vector<16x128xi1>, vector<16x128xf32>
    %cst_10 = arith.constant 1.000000e+00 : f32
    %30 = vector.broadcast %cst_10 : f32 to vector<16x128xf32>
    %31 = arith.addf %30, %25 : vector<16x128xf32>
    %32 = arith.divf %29, %31 : vector<16x128xf32>
    %33 = arith.mulf %32, %32 : vector<16x128xf32>
    %34 = arith.mulf %33, %17 : vector<16x128xf32>
    %c0_11 = arith.constant 0 : index
    %c0_12 = arith.constant 0 : index
    %c0_13 = arith.constant 0 : index
    %35 = vector.load %arg4[%c0_11, %c0_12, %c0_13] : memref<1x8x128xf32, #tpu.memory_space<vmem>>, vector<1x8x128xf32>
    %36 = vector.shape_cast %34 : vector<16x128xf32> to vector<2x8x128xf32>
    %cst_14 = arith.constant dense<0.000000e+00> : vector<8x128xf32>
    %37 = vector.multi_reduction <add>, %36, %cst_14 [0] : vector<2x8x128xf32> to vector<8x128xf32>
    %38 = vector.shape_cast %37 : vector<8x128xf32> to vector<1x8x128xf32>
    %39 = arith.addf %35, %38 : vector<1x8x128xf32>
    %c0_15 = arith.constant 0 : index
    %c0_16 = arith.constant 0 : index
    %c0_17 = arith.constant 0 : index
    %40 = vector.load %arg4[%c0_15, %c0_16, %c0_17] : memref<1x8x128xf32, #tpu.memory_space<vmem>>, vector<1x8x128xf32>
    tpu.vector_store %arg4[%c0_15, %c0_16, %c0_17], %39 {strides = array<i32>} : memref<1x8x128xf32, #tpu.memory_space<vmem>>, vector<1x8x128xf32>,
    return
  }
  func.func @transform_0(%arg0: i32, %arg1: i32) -> (i32, i32) {
    %c1_i32 = arith.constant 1 : i32
    %0 = arith.muli %arg0, %c1_i32 : i32
    %1 = arith.addi %0, %arg1 : i32
    %c0_i32 = arith.constant 0 : i32
    %c0_i32_0 = arith.constant 0 : i32
    return %1, %c0_i32 : i32, i32
  }
  func.func @transform_1(%arg0: i32, %arg1: i32) -> (i32, i32) {
    %c1_i32 = arith.constant 1 : i32
    %0 = arith.muli %arg0, %c1_i32 : i32
    %1 = arith.addi %0, %arg1 : i32
    %c0_i32 = arith.constant 0 : i32
    %c0_i32_0 = arith.constant 0 : i32
    return %1, %c0_i32 : i32, i32
  }
  func.func @transform_2(%arg0: i32, %arg1: i32) -> (i32, i32, i32) {
    %c0_i32 = arith.constant 0 : i32
    %c0_i32_0 = arith.constant 0 : i32
    %c0_i32_1 = arith.constant 0 : i32
    return %arg0, %c0_i32, %c0_i32_0 : i32, i32, i32
  }
}

</mosaic_0001>

<llo_original>
// kernel: focal_loss.1
$region0: #{focal_loss.1}
  #allocation0 [shape = 'u32[]', space=smem, size = 0x4, offset = 0x4, fixed_abs, tag = 'smem constant byte address 0x4 - core index']
  #allocation1 [shape = 'u32[144,128]{1,0:T(1,128)}', space=vmem, size = 0x12000, scoped, tag = 'internal scratch']
  %s0 = inlined_call_operand.vmem [shape: f32[16,128], index: 0, kind: input, shape index: {}]
  %s1 = inlined_call_operand.vmem [shape: f32[16,128], index: 1, kind: input, shape index: {}]
  %s2 = inlined_call_operand.vmem [shape: f32[1,8,128], index: 2, kind: output, shape index: {}]
  %s3 = sld [smem:[#allocation0]]
  $region22: #{focal_loss.1} parent=0
    _
  %s5 = ssub.s32 1, %s3
  %s6 = scalar_select 0, %s5, %s3
  // Predicated region
  $region2: #{focal_loss.1} parent=0 // pred_check
    _
  $region3: #{focal_loss.1} parent=0 // pred_check_branch
    %8 = sbr.rel (0) target = $region5
  $region4: #{focal_loss.1} parent=0 // pred_region
    %s9 = sadd.s32 0, 0
    %s10 = smul.u32 2, %s9
    %p11 = scmp.lt.s32.totalorder %s10, 1
    %s12 = scalar_select %p11, %s10, 1
    %s13 = smul.addr %s12, 8
    %s14 = scalar_lea.vmem %s0, %s13
    %s15 = sadd.s32 0, 0
    %s16 = smul.u32 2, %s15
  $region5: #{focal_loss.1} parent=0 // pred_fallthru
    _
  // Predicated region
  $region6: #{focal_loss.1} parent=0 // pred_check
    _
  $region7: #{focal_loss.1} parent=0 // pred_check_branch
    %18 = sbr.rel (0) target = $region9
  $region8: #{focal_loss.1} parent=0 // pred_region
    %s19 = sadd.s32 0, 0
    %s20 = smul.u32 2, %s19
    %p21 = scmp.lt.s32.totalorder %s20, 1
    %s22 = scalar_select %p21, %s20, 1
    %s23 = smul.addr %s22, 8
    %s24 = scalar_lea.vmem %s1, %s23
    %s25 = sadd.s32 0, 0
    %s26 = smul.u32 2, %s25
  $region9: #{focal_loss.1} parent=0 // pred_fallthru
    _
  %s27 = sadd.s32 0, 0
  %s28 = smul.u32 2, %s27
  %p29 = scmp.lt.s32.totalorder %s28, 1
  %s30 = scalar_select %p29, %s28, 1
  %s31 = smul.addr %s30, 8
  %s32 = scalar_lea.vmem %s0, %s31
  %s33 = sadd.s32 0, 0
  %s34 = smul.u32 2, %s33
  %p35 = scmp.lt.s32.totalorder %s34, 1
  %s36 = scalar_select %p35, %s34, 1
  %s37 = smul.addr %s36, 8
  %s38 = scalar_lea.vmem %s1, %s37
  %s39 = sadd.s32 0, 0
  %s40 = smul.u32 2, %s39
  %p41 = scmp.lt.s32.totalorder %s40, 1
  %s42 = scalar_select %p41, %s40, 1
  %s43 = smul.addr %s42, 8
  %s44 = scalar_lea.vmem %s0, %s43
  %s45 = sadd.s32 0, 0
  %s46 = smul.u32 2, %s45
  %s47 = sadd.s32 0, 0
  %s48 = smul.u32 2, %s47
  %p49 = scmp.lt.s32.totalorder %s48, 1
  %s50 = scalar_select %p49, %s48, 1
  %s51 = smul.addr %s50, 8
  %s52 = scalar_lea.vmem %s1, %s51
  %s53 = sadd.s32 0, 0
  %s54 = smul.u32 2, %s53
  %p55 = scmp.eq.s32.totalorder 0, 0
  // Predicated region
  $region10: #{focal_loss.1} parent=0 // pred_check
    %p56 = pneg %p55
  $region11: #{focal_loss.1} parent=0 // pred_check_branch
    %58 = sbr.rel (%p56) target = $region13
  $region12: #{focal_loss.1} parent=0 // pred_region
    %59 = vst [vmem:[%s2] sm:$0xff] 0.0
  $region13: #{focal_loss.1} parent=0 // pred_fallthru
    _
  %v60 = vld [vmem:[%s44] sm:$0xff]
  %v61 = vld [vmem:[%s44 + $0x8] sm:$0xff]
  %v62 = vld [vmem:[%s52] sm:$0xff]
  %v63 = vld [vmem:[%s52 + $0x8] sm:$0xff]
  %v64 = vmul.f32 %v60, %v62
  %v65 = vmul.f32 %v61, %v63
  %v66 = vsub.f32 %v60, %v64
  %v67 = vsub.f32 %v61, %v65
  %v68 = vsub.f32 0.0, %v60
  %v69 = vsub.f32 0.0, %v61
  %v70 = vmax.f32 %v68, 0.0
  %v71 = vmax.f32 %v69, 0.0
  %v72 = vadd.f32 %v66, %v70
  %v73 = vadd.f32 %v67, %v71
  %v74 = vand.u32 2147483647, %v60
  %v75 = vand.u32 2147483647, %v61
  %v76 = vsub.f32 0.0, %v74
  %v77 = vsub.f32 0.0, %v75
  %v78 = vmul.f32 %v76, 1.442695
  %v79 = vpow.pop %v78
  %v80 = vmul.f32 %v77, 1.442695
  %v81 = vpow.pop %v80
  %v82 = vadd.f32 %v79, 1.0
  %v83 = vlog2.pop %v82
  %v84 = vmul.f32 %v83, 0.6931472
  %v85 = vmul.f32 -0.5, %v79
  %v86 = vadd.f32 %v85, 1.0
  %v87 = vmul.f32 %v86, %v79
  %v88 = vand.u32 2147483647, %v79
  %vm89 = vcmp.lt.f32.partialorder %v88, 0.0004427343
  %v90 = vsel %vm89, %v87, %v84
  %v91 = vadd.f32 %v81, 1.0
  %v92 = vlog2.pop %v91
  %v93 = vmul.f32 %v92, 0.6931472
  %v94 = vmul.f32 -0.5, %v81
  %v95 = vadd.f32 %v94, 1.0
  %v96 = vmul.f32 %v95, %v81
  %v97 = vand.u32 2147483647, %v81
  %vm98 = vcmp.lt.f32.partialorder %v97, 0.0004427343
  %v99 = vsel %vm98, %v96, %v93
  %v100 = vadd.f32 %v72, %v90
  %v101 = vadd.f32 %v73, %v99
  %v102 = vmul.f32 %v60, 2.0
  %v103 = vmul.f32 %v61, 2.0
  %v104 = vmul.f32 %v102, %v62
  %v105 = vmul.f32 %v103, %v63
  %v106 = vsub.f32 %v60, %v104
  %v107 = vsub.f32 %v61, %v105
  %v108 = vand.u32 2147483647, %v106
  %v109 = vand.u32 2147483647, %v107
  %v110 = vsub.f32 0.0, %v108
  %v111 = vsub.f32 0.0, %v109
  %v112 = vmul.f32 %v110, 1.442695
  %v113 = vpow.pop %v112
  %v114 = vmul.f32 %v111, 1.442695
  %v115 = vpow.pop %v114
  %vm116 = vcmp.ge.f32.partialorder %v106, 0.0
  %vm117 = vcmp.ge.f32.partialorder %v107, 0.0
  %v118 = vsel %vm116, 1.0, %v113
  %v119 = vsel %vm117, 1.0, %v115
  %v120 = vadd.f32 %v113, 1.0
  %v121 = vadd.f32 %v115, 1.0
  %v122 = vrcp.pop %v120
  %v123 = vmul.f32 %v118, %v122
  %v124 = vrcp.pop %v121
  %v125 = vmul.f32 %v119, %v124
  %v126 = vmul.f32 %v123, %v123
  %v127 = vmul.f32 %v125, %v125
  %v128 = vmul.f32 %v126, %v100
  %v129 = vmul.f32 %v127, %v101
  %v130 = vld [vmem:[%s2] sm:$0xff]
  %v131 = vadd.f32 %v128, %v129
  %v132 = vadd.f32 %v130, %v131
  %133 = vst [vmem:[%s2] sm:$0xff] %v132
  // Predicated region
  $region14: #{focal_loss.1} parent=0 // pred_check
    _
  $region15: #{focal_loss.1} parent=0 // pred_check_branch
    %135 = sbr.rel (0) target = $region17
  $region16: #{focal_loss.1} parent=0 // pred_region
    _
  $region17: #{focal_loss.1} parent=0 // pred_fallthru
    _
  // Predicated region
  $region18: #{focal_loss.1} parent=0 // pred_check
    _
  $region19: #{focal_loss.1} parent=0 // pred_check_branch
    %137 = sbr.rel (0) target = $region21
  $region20: #{focal_loss.1} parent=0 // pred_region
    _
  $region21: #{focal_loss.1} parent=0 // pred_fallthru
    _

</llo_original>
